<compile_context>
chip_gen: v7x
topology: tpu7x:2x2x1
jax: 0.10.0
libtpu: 0.0.40
codegen_flags: <defaults>
</compile_context>

<pallas_src>
import math

import jax
import jax.numpy as jnp
from jax.experimental import pallas as pl
from jax.experimental.pallas import tpu as pltpu


def _bahdanau_attn_kernel(h_ref, enc_ref, w_ref, b_ref, other_ref, out_ref):
    """Bahdanau concat-linear attention energies + softmax (one invocation).

    h_ref     : (1, H)   decoder hidden state (row)
    enc_ref   : (S, H)   encoder outputs, natural layout (no wrapper transpose)
    w_ref     : (H, 2H)  nn.Linear(2H, H).weight, passed whole
    b_ref     : (1, H)   nn.Linear bias (row)
    other_ref : (1, H)   the 'other' parameter (v vector)
    out_ref   : (1, S)   softmax attention weights (lane-major)
    """
    H = h_ref.shape[-1]
    other = other_ref[...]                                     # (1, H)

    # Fold `other` into the Linear weight: v = other @ W  -> (1, 2H).
    # (One tiny MXU push; replaces the old (H,H)@(H,S) matmul entirely.)
    v = jnp.dot(other, w_ref[...], preferred_element_type=jnp.float32)
    v_h = v[:, :H]          # part acting on the decoder hidden state
    v_e = v[:, H:]          # part acting on each encoder output

    # Constant (same for every timestep) piece of each score:
    #   c = other . (W_h @ h + b) = (v_h . h) + (other . b)     -> (1, 1)
    c = (jnp.sum(v_h * h_ref[...], axis=-1, keepdims=True)
         + jnp.sum(other * b_ref[...], axis=-1, keepdims=True))

    # All S scores with a single (1,H)@(H,S) matvec.  The (S,H)->(H,S) flip
    # happens in VMEM on the XLU (cheap at S <= 100); S stays on lanes so the
    # softmax reduction and the output store below are lane-major.
    scores = jnp.dot(v_e, enc_ref[...].T,
                     preferred_element_type=jnp.float32) + c    # (1, S)

    # Numerically-stable softmax over the sequence (lane) axis.
    m = jnp.max(scores, axis=-1, keepdims=True)
    p = jnp.exp(scores - m)
    l = jnp.sum(p, axis=-1, keepdims=True)
    out_ref[...] = p * pl.reciprocal(l, approx=True)            # EUP + VPU


def bahdanau_attn_forward(hidden, encoder_outputs, params):
    """Pallas equivalent of BahadanauAttn.forward(hidden, encoder_outputs).

    hidden          : (1, H)      decoder hidden state
    encoder_outputs : (S, 1, H)   encoder output per timestep
    returns         : (1, 1, S)   softmax attention weights
    """
    w = params["attn_w"]          # (H, 2H)  nn.Linear(2H, H).weight
    b = params["attn_b"]          # (H,)     nn.Linear(2H, H).bias
    other = params["other"]       # (1, H)
    H = w.shape[0]
    S = encoder_outputs.shape[0]

    # Only free, contiguous reshapes here -- no transposes, slices or astype.
    enc = encoder_outputs.reshape(S, H)    # (S, H), natural layout
    b_row = b.reshape(1, H)                # (1, H)

    attn = pl.pallas_call(
        _bahdanau_attn_kernel,
        out_shape=jax.ShapeDtypeStruct((1, S), jnp.float32),
        in_specs=[pl.BlockSpec(memory_space=pltpu.MemorySpace.VMEM)] * 5,
        out_specs=pl.BlockSpec(memory_space=pltpu.MemorySpace.VMEM),
    )(hidden, enc, w, b_row, other)

    # Match PyTorch: F.softmax(e).unsqueeze(0).unsqueeze(0) -> (1, 1, S).
    return attn.reshape(1, 1, S)


def bahdanau_attn_reference(hidden, encoder_outputs, params):
    """Pure-JAX reference mirroring the PyTorch module line-by-line."""
    w, b, other = params["attn_w"], params["attn_b"], params["other"]
    S = encoder_outputs.shape[0]
    energies = []
    for i in range(S):
        cat = jnp.concatenate([hidden, encoder_outputs[i]], axis=1)  # (1, 2H)
        energy = cat @ w.T + b                                       # (1, H)
        energies.append((other @ energy.T)[0, 0])                    # scalar
    e = jnp.stack(energies)                                          # (S,)
    return jax.nn.softmax(e).reshape(1, 1, S)


def init_params(key, hidden_size):
    k_w, k_b, k_o = jax.random.split(key, 3)
    bound = 1.0 / math.sqrt(2 * hidden_size)     # nn.Linear(2H, H) default init
    return {
        "attn_w": jax.random.uniform(k_w, (hidden_size, 2 * hidden_size),
                                     jnp.float32, -bound, bound),
        "attn_b": jax.random.uniform(k_b, (hidden_size,), jnp.float32,
                                     -bound, bound),
        # torch.FloatTensor(1, H) is uninitialized in the original module;
        # use a deterministic normal here so the test is reproducible.
        "other": jax.random.normal(k_o, (1, hidden_size), jnp.float32),
    }


if __name__ == "__main__":
    hidden_size = 256   # matches the module's own hidden_size
    seq_len = 8         # well under MAX_LENGTH = 100

    key = jax.random.PRNGKey(0)
    k_params, k_hid, k_enc = jax.random.split(key, 3)
    params = init_params(k_params, hidden_size)

    hidden = jax.random.normal(k_hid, (1, hidden_size), jnp.float32)
    encoder_outputs = jax.random.normal(k_enc, (seq_len, 1, hidden_size),
                                        jnp.float32)

    attn = bahdanau_attn_forward(hidden, encoder_outputs, params)
    attn = jax.block_until_ready(attn)

    attn_ref = bahdanau_attn_reference(hidden, encoder_outputs, params)
    assert attn.shape == (1, 1, seq_len)
    # Tolerance covers (a) the algebraic fold's different f32 summation order
    # and (b) pl.reciprocal(approx=True) in the softmax normalization; any
    # real bug would be off by orders of magnitude more.
    assert jnp.allclose(attn, attn_ref, atol=5e-4, rtol=5e-4)
    assert jnp.allclose(jnp.sum(attn), 1.0, atol=1e-3)

    print("KERNEL_OK")
</pallas_src>

<mosaic_0001>
module attributes {stable_mosaic.version = 11 : i64} {
  func.func @_bahdanau_attn_kernel(%arg0: memref<1x256xf32, #tpu.memory_space<vmem>>, %arg1: memref<8x256xf32, #tpu.memory_space<vmem>>, %arg2: memref<256x512xf32, #tpu.memory_space<vmem>>, %arg3: memref<1x256xf32, #tpu.memory_space<vmem>>, %arg4: memref<1x256xf32, #tpu.memory_space<vmem>>, %arg5: memref<1x8xf32, #tpu.memory_space<vmem>>) attributes {dimension_semantics = [], scalar_prefetch = 0 : i64, scratch_operands = 0 : i64, tpu.core_type = #tpu.core_type<tc>} {
    %c0 = arith.constant 0 : index
    %c0_0 = arith.constant 0 : index
    %0 = vector.load %arg4[%c0, %c0_0] : memref<1x256xf32, #tpu.memory_space<vmem>>, vector<1x256xf32>
    %c0_1 = arith.constant 0 : index
    %c0_2 = arith.constant 0 : index
    %1 = vector.load %arg2[%c0_1, %c0_2] : memref<256x512xf32, #tpu.memory_space<vmem>>, vector<256x512xf32>
    %cst = arith.constant dense<0.000000e+00> : vector<1x512xf32>
    %2 = tpu.matmul %0, %1, %cst {dimension_numbers = #tpu.dot_dimension_numbers<[1], [0], [0], [1], [0, 0, 1, 1], [], []>} : vector<1x256xf32>, vector<256x512xf32>, vector<1x512xf32> -> vector<1x512xf32>
    %3 = vector.extract_strided_slice %2 {offsets = [0, 0], sizes = [1, 256], strides = [1, 1]} : vector<1x512xf32> to vector<1x256xf32>
    %4 = vector.extract_strided_slice %2 {offsets = [0, 256], sizes = [1, 256], strides = [1, 1]} : vector<1x512xf32> to vector<1x256xf32>
    %c0_3 = arith.constant 0 : index
    %c0_4 = arith.constant 0 : index
    %5 = vector.load %arg0[%c0_3, %c0_4] : memref<1x256xf32, #tpu.memory_space<vmem>>, vector<1x256xf32>
    %6 = arith.mulf %3, %5 : vector<1x256xf32>
    %cst_5 = arith.constant dense<0.000000e+00> : vector<1xf32>
    %7 = vector.multi_reduction <add>, %6, %cst_5 [1] : vector<1x256xf32> to vector<1xf32>
    %8 = vector.shape_cast %7 : vector<1xf32> to vector<1x1xf32>
    %c0_6 = arith.constant 0 : index
    %c0_7 = arith.constant 0 : index
    %9 = vector.load %arg3[%c0_6, %c0_7] : memref<1x256xf32, #tpu.memory_space<vmem>>, vector<1x256xf32>
    %10 = arith.mulf %0, %9 : vector<1x256xf32>
    %cst_8 = arith.constant dense<0.000000e+00> : vector<1xf32>
    %11 = vector.multi_reduction <add>, %10, %cst_8 [1] : vector<1x256xf32> to vector<1xf32>
    %12 = vector.shape_cast %11 : vector<1xf32> to vector<1x1xf32>
    %13 = arith.addf %8, %12 : vector<1x1xf32>
    %c0_9 = arith.constant 0 : index
    %c0_10 = arith.constant 0 : index
    %14 = vector.load %arg1[%c0_9, %c0_10] : memref<8x256xf32, #tpu.memory_space<vmem>>, vector<8x256xf32>
    %15 = tpu.transpose %14, [1, 0] : vector<8x256xf32> -> vector<256x8xf32>
    %cst_11 = arith.constant dense<0.000000e+00> : vector<1x8xf32>
    %16 = tpu.matmul %4, %15, %cst_11 {dimension_numbers = #tpu.dot_dimension_numbers<[1], [0], [0], [1], [0, 0, 1, 1], [], []>} : vector<1x256xf32>, vector<256x8xf32>, vector<1x8xf32> -> vector<1x8xf32>
    %17 = vector.broadcast %13 : vector<1x1xf32> to vector<1x8xf32>
    %18 = arith.addf %16, %17 : vector<1x8xf32>
    %cst_12 = arith.constant dense<0xFF800000> : vector<1xf32>
    %19 = vector.multi_reduction <maximumf>, %18, %cst_12 [1] : vector<1x8xf32> to vector<1xf32>
    %20 = vector.shape_cast %19 : vector<1xf32> to vector<1x1xf32>
    %21 = vector.broadcast %20 : vector<1x1xf32> to vector<1x8xf32>
    %22 = arith.subf %18, %21 : vector<1x8xf32>
    %23 = math.exp %22 : vector<1x8xf32>
    %cst_13 = arith.constant dense<0.000000e+00> : vector<1xf32>
    %24 = vector.multi_reduction <add>, %23, %cst_13 [1] : vector<1x8xf32> to vector<1xf32>
    %25 = vector.shape_cast %24 : vector<1xf32> to vector<1x1xf32>
    %26 = tpu.reciprocal %25 {approx = true} : vector<1x1xf32> -> vector<1x1xf32>
    %27 = vector.broadcast %26 : vector<1x1xf32> to vector<1x8xf32>
    %28 = arith.mulf %23, %27 : vector<1x8xf32>
    %c0_14 = arith.constant 0 : index
    %c0_15 = arith.constant 0 : index
    %29 = vector.load %arg5[%c0_14, %c0_15] : memref<1x8xf32, #tpu.memory_space<vmem>>, vector<1x8xf32>
    tpu.vector_store %arg5[%c0_14, %c0_15], %28 {strides = array<i32>} : memref<1x8xf32, #tpu.memory_space<vmem>>, vector<1x8xf32>,
    return
  }
}

</mosaic_0001>

<llo_original>
// kernel: tpu_custom_call.1
$region0: #{tpu_custom_call.1}
  #allocation0 [shape = 'u32[]', space=smem, size = 0x4, offset = 0x4, fixed_abs, tag = 'smem constant byte address 0x4 - core index']
  #allocation1 [shape = 'u32[144,128]{1,0:T(1,128)}', space=vmem, size = 0x12000, scoped, tag = 'internal scratch']
  %s0 = inlined_call_operand.hbm [shape: f32[1,256], index: 0, kind: input, shape index: {}]
  %s1 = inlined_call_operand.hbm [shape: f32[8,256], index: 1, kind: input, shape index: {}]
  %s2 = inlined_call_operand.hbm [shape: f32[256,512], index: 2, kind: input, shape index: {}]
  %s3 = inlined_call_operand.vmem [shape: f32[1,256], index: 3, kind: input, shape index: {}]
  %s4 = inlined_call_operand.vmem [shape: f32[1,256], index: 4, kind: input, shape index: {}]
  %s5 = inlined_call_operand.hbm [shape: f32[1,8], index: 5, kind: output, shape index: {}]
  %s6 = sld [smem:[#allocation0]]
  $region42: #{tpu_custom_call.1} parent=0
    _
  %s8 = ssub.s32 1, %s6
  %s9 = scalar_select 0, %s8, %s6
  $region1: #{tpu_custom_call.1} parent=0
    #allocation2 [shape = 'u8[1024]{0}', space=vmem, size = 0x400, scoped, tag = 'input window, operand 0, single buffered']
    #allocation3 [shape = 's32[1]{0}', space=sflag, size = 0x4, scoped, tag = 'scoped memory for tpu_custom_call.1']
    #allocation4 [shape = 's32[1]{0}', space=sflag, size = 0x4, scoped, tag = 'scoped memory for tpu_custom_call.1']
    #allocation5 [shape = 'u8[8192]{0}', space=vmem, size = 0x2000, scoped, tag = 'input window, operand 1, single buffered']
    #allocation6 [shape = 's32[1]{0}', space=sflag, size = 0x4, scoped, tag = 'scoped memory for tpu_custom_call.1']
    #allocation7 [shape = 'u8[524288]{0}', space=vmem, size = 0x80000, scoped, tag = 'input window, operand 2, single buffered']
    #allocation8 [shape = 'u8[512]{0}', space=vmem, size = 0x400, scoped, tag = 'output window, operand 0, single buffered']
    %10 = vsyncpa [#allocation3], 0
    %11 = vsyncpa [#allocation6], 0
    %12 = vsyncpa [#allocation4], 0
    // Predicated region
    $region2: #{tpu_custom_call.1} parent=1 // pred_check
      _
    $region3: #{tpu_custom_call.1} parent=1 // pred_check_branch
      %14 = sbr.rel (0) target = $region5
    $region4: #{tpu_custom_call.1} parent=1 // pred_region
      %s16 = ssub.s32 32, 32
      %17 = vsyncadd [#allocation3], %s16
      %s19 = sshll.u32 [#allocation2], 4
      %s20 = int_to_ptr.vmem [resolvable:$true] %s19
      %22 = dma.hbm_to_vmem [thread:$0]  %s0, 32, %s20, [#allocation3]
    $region5: #{tpu_custom_call.1} parent=1 // pred_fallthru
      _
    // Predicated region
    $region6: #{tpu_custom_call.1} parent=1 // pred_check
      _
    $region7: #{tpu_custom_call.1} parent=1 // pred_check_branch
      %24 = sbr.rel (0) target = $region9
    $region8: #{tpu_custom_call.1} parent=1 // pred_region
      %s26 = ssub.s32 256, 256
      %27 = vsyncadd [#allocation6], %s26
      %s29 = sshll.u32 [#allocation5], 4
      %s30 = int_to_ptr.vmem [resolvable:$true] %s29
      %32 = dma.hbm_to_vmem [thread:$0]  %s1, 256, %s30, [#allocation6]
    $region9: #{tpu_custom_call.1} parent=1 // pred_fallthru
      _
    // Predicated region
    $region10: #{tpu_custom_call.1} parent=1 // pred_check
      _
    $region11: #{tpu_custom_call.1} parent=1 // pred_check_branch
      %34 = sbr.rel (0) target = $region13
    $region12: #{tpu_custom_call.1} parent=1 // pred_region
      %s36 = ssub.s32 16384, 16384
      %37 = vsyncadd [#allocation6], %s36
      %s38 = sshll.u32 [#allocation7], 4
      %s39 = int_to_ptr.vmem [resolvable:$true] %s38
      %44 = dma.hbm_to_vmem [thread:$0]  %s2, 16384, %s39, [#allocation6], 512, 512, 32
    $region13: #{tpu_custom_call.1} parent=1 // pred_fallthru
      _
    // Predicated region
    $region14: #{tpu_custom_call.1} parent=1 // pred_check
      _
    $region15: #{tpu_custom_call.1} parent=1 // pred_check_branch
      %46 = sbr.rel (0) target = $region17
    $region16: #{tpu_custom_call.1} parent=1 // pred_region
      _
    $region17: #{tpu_custom_call.1} parent=1 // pred_fallthru
      _
    // Predicated region
    $region18: #{tpu_custom_call.1} parent=1 // pred_check
      _
    $region19: #{tpu_custom_call.1} parent=1 // pred_check_branch
      %48 = sbr.rel (0) target = $region21
    $region20: #{tpu_custom_call.1} parent=1 // pred_region
      _
    $region21: #{tpu_custom_call.1} parent=1 // pred_fallthru
      _
    // Predicated region
    $region22: #{tpu_custom_call.1} parent=1 // pred_check
      _
    $region23: #{tpu_custom_call.1} parent=1 // pred_check_branch
      %50 = sbr.rel (0) target = $region25
    $region24: #{tpu_custom_call.1} parent=1 // pred_region
      %51 = dma.done [#allocation3], 32
    $region25: #{tpu_custom_call.1} parent=1 // pred_fallthru
      _
    // Predicated region
    $region26: #{tpu_custom_call.1} parent=1 // pred_check
      _
    $region27: #{tpu_custom_call.1} parent=1 // pred_check_branch
      %53 = sbr.rel (0) target = $region29
    $region28: #{tpu_custom_call.1} parent=1 // pred_region
      %54 = dma.done [#allocation6], 256
    $region29: #{tpu_custom_call.1} parent=1 // pred_fallthru
      _
    // Predicated region
    $region30: #{tpu_custom_call.1} parent=1 // pred_check
      _
    $region31: #{tpu_custom_call.1} parent=1 // pred_check_branch
      %56 = sbr.rel (0) target = $region33
    $region32: #{tpu_custom_call.1} parent=1 // pred_region
      %57 = dma.done [#allocation6], 16384
    $region33: #{tpu_custom_call.1} parent=1 // pred_fallthru
      _
    %v58 = vld [vmem:[%s4] sm:$0x3]
    %v59 = vld [vmem:[#allocation7] sm:$0xff]
    %v60 = vld [vmem:[#allocation7 + $0x8] sm:$0xff]
    %v61 = vld [vmem:[#allocation7 + $0x10] sm:$0xff]
    %v62 = vld [vmem:[#allocation7 + $0x18] sm:$0xff]
    %v63 = vld [vmem:[#allocation7 + $0x20] sm:$0xff]
    %v64 = vld [vmem:[#allocation7 + $0x28] sm:$0xff]
    %v65 = vld [vmem:[#allocation7 + $0x30] sm:$0xff]
    %v66 = vld [vmem:[#allocation7 + $0x38] sm:$0xff]
    %v67 = vld [vmem:[#allocation7 + $0x40] sm:$0xff]
    %v68 = vld [vmem:[#allocation7 + $0x48] sm:$0xff]
    %v69 = vld [vmem:[#allocation7 + $0x50] sm:$0xff]
    %v70 = vld [vmem:[#allocation7 + $0x58] sm:$0xff]
    %v71 = vld [vmem:[#allocation7 + $0x60] sm:$0xff]
    %v72 = vld [vmem:[#allocation7 + $0x68] sm:$0xff]
    %v73 = vld [vmem:[#allocation7 + $0x70] sm:$0xff]
    %v74 = vld [vmem:[#allocation7 + $0x78] sm:$0xff]
    %v75 = vld [vmem:[#allocation7 + $0x80] sm:$0xff]
    %v76 = vld [vmem:[#allocation7 + $0x88] sm:$0xff]
    %v77 = vld [vmem:[#allocation7 + $0x90] sm:$0xff]
    %v78 = vld [vmem:[#allocation7 + $0x98] sm:$0xff]
    %v79 = vld [vmem:[#allocation7 + $0xa0] sm:$0xff]
    %v80 = vld [vmem:[#allocation7 + $0xa8] sm:$0xff]
    %v81 = vld [vmem:[#allocation7 + $0xb0] sm:$0xff]
    %v82 = vld [vmem:[#allocation7 + $0xb8] sm:$0xff]
    %v83 = vld [vmem:[#allocation7 + $0xc0] sm:$0xff]
    %v84 = vld [vmem:[#allocation7 + $0xc8] sm:$0xff]
    %v85 = vld [vmem:[#allocation7 + $0xd0] sm:$0xff]
    %v86 = vld [vmem:[#allocation7 + $0xd8] sm:$0xff]
    %v87 = vld [vmem:[#allocation7 + $0xe0] sm:$0xff]
    %v88 = vld [vmem:[#allocation7 + $0xe8] sm:$0xff]
    %v89 = vld [vmem:[#allocation7 + $0xf0] sm:$0xff]
    %v90 = vld [vmem:[#allocation7 + $0xf8] sm:$0xff]
    %v91 = vld [vmem:[#allocation7 + $0x100] sm:$0xff]
    %v92 = vld [vmem:[#allocation7 + $0x108] sm:$0xff]
    %v93 = vld [vmem:[#allocation7 + $0x110] sm:$0xff]
    %v94 = vld [vmem:[#allocation7 + $0x118] sm:$0xff]
    %v95 = vld [vmem:[#allocation7 + $0x120] sm:$0xff]
    %v96 = vld [vmem:[#allocation7 + $0x128] sm:$0xff]
    %v97 = vld [vmem:[#allocation7 + $0x130] sm:$0xff]
    %v98 = vld [vmem:[#allocation7 + $0x138] sm:$0xff]
    %v99 = vld [vmem:[#allocation7 + $0x140] sm:$0xff]
    %v100 = vld [vmem:[#allocation7 + $0x148] sm:$0xff]
    %v101 = vld [vmem:[#allocation7 + $0x150] sm:$0xff]
    %v102 = vld [vmem:[#allocation7 + $0x158] sm:$0xff]
    %v103 = vld [vmem:[#allocation7 + $0x160] sm:$0xff]
    %v104 = vld [vmem:[#allocation7 + $0x168] sm:$0xff]
    %v105 = vld [vmem:[#allocation7 + $0x170] sm:$0xff]
    %v106 = vld [vmem:[#allocation7 + $0x178] sm:$0xff]
    %v107 = vld [vmem:[#allocation7 + $0x180] sm:$0xff]
    %v108 = vld [vmem:[#allocation7 + $0x188] sm:$0xff]
    %v109 = vld [vmem:[#allocation7 + $0x190] sm:$0xff]
    %v110 = vld [vmem:[#allocation7 + $0x198] sm:$0xff]
    %v111 = vld [vmem:[#allocation7 + $0x1a0] sm:$0xff]
    %v112 = vld [vmem:[#allocation7 + $0x1a8] sm:$0xff]
    %v113 = vld [vmem:[#allocation7 + $0x1b0] sm:$0xff]
    %v114 = vld [vmem:[#allocation7 + $0x1b8] sm:$0xff]
    %v115 = vld [vmem:[#allocation7 + $0x1c0] sm:$0xff]
    %v116 = vld [vmem:[#allocation7 + $0x1c8] sm:$0xff]
    %v117 = vld [vmem:[#allocation7 + $0x1d0] sm:$0xff]
    %v118 = vld [vmem:[#allocation7 + $0x1d8] sm:$0xff]
    %v119 = vld [vmem:[#allocation7 + $0x1e0] sm:$0xff]
    %v120 = vld [vmem:[#allocation7 + $0x1e8] sm:$0xff]
    %v121 = vld [vmem:[#allocation7 + $0x1f0] sm:$0xff]
    %v122 = vld [vmem:[#allocation7 + $0x1f8] sm:$0xff]
    %v123 = vld [vmem:[#allocation7 + $0x200] sm:$0xff]
    %v124 = vld [vmem:[#allocation7 + $0x208] sm:$0xff]
    %v125 = vld [vmem:[#allocation7 + $0x210] sm:$0xff]
    %v126 = vld [vmem:[#allocation7 + $0x218] sm:$0xff]
    %v127 = vld [vmem:[#allocation7 + $0x220] sm:$0xff]
    %v128 = vld [vmem:[#allocation7 + $0x228] sm:$0xff]
    %v129 = vld [vmem:[#allocation7 + $0x230] sm:$0xff]
    %v130 = vld [vmem:[#allocation7 + $0x238] sm:$0xff]
    %v131 = vld [vmem:[#allocation7 + $0x240] sm:$0xff]
    %v132 = vld [vmem:[#allocation7 + $0x248] sm:$0xff]
    %v133 = vld [vmem:[#allocation7 + $0x250] sm:$0xff]
    %v134 = vld [vmem:[#allocation7 + $0x258] sm:$0xff]
    %v135 = vld [vmem:[#allocation7 + $0x260] sm:$0xff]
    %v136 = vld [vmem:[#allocation7 + $0x268] sm:$0xff]
    %v137 = vld [vmem:[#allocation7 + $0x270] sm:$0xff]
    %v138 = vld [vmem:[#allocation7 + $0x278] sm:$0xff]
    %v139 = vld [vmem:[#allocation7 + $0x280] sm:$0xff]
    %v140 = vld [vmem:[#allocation7 + $0x288] sm:$0xff]
    %v141 = vld [vmem:[#allocation7 + $0x290] sm:$0xff]
    %v142 = vld [vmem:[#allocation7 + $0x298] sm:$0xff]
    %v143 = vld [vmem:[#allocation7 + $0x2a0] sm:$0xff]
    %v144 = vld [vmem:[#allocation7 + $0x2a8] sm:$0xff]
    %v145 = vld [vmem:[#allocation7 + $0x2b0] sm:$0xff]
    %v146 = vld [vmem:[#allocation7 + $0x2b8] sm:$0xff]
    %v147 = vld [vmem:[#allocation7 + $0x2c0] sm:$0xff]
    %v148 = vld [vmem:[#allocation7 + $0x2c8] sm:$0xff]
    %v149 = vld [vmem:[#allocation7 + $0x2d0] sm:$0xff]
    %v150 = vld [vmem:[#allocation7 + $0x2d8] sm:$0xff]
    %v151 = vld [vmem:[#allocation7 + $0x2e0] sm:$0xff]
    %v152 = vld [vmem:[#allocation7 + $0x2e8] sm:$0xff]
    %v153 = vld [vmem:[#allocation7 + $0x2f0] sm:$0xff]
    %v154 = vld [vmem:[#allocation7 + $0x2f8] sm:$0xff]
    %v155 = vld [vmem:[#allocation7 + $0x300] sm:$0xff]
    %v156 = vld [vmem:[#allocation7 + $0x308] sm:$0xff]
    %v157 = vld [vmem:[#allocation7 + $0x310] sm:$0xff]
    %v158 = vld [vmem:[#allocation7 + $0x318] sm:$0xff]
    %v159 = vld [vmem:[#allocation7 + $0x320] sm:$0xff]
    %v160 = vld [vmem:[#allocation7 + $0x328] sm:$0xff]
    %v161 = vld [vmem:[#allocation7 + $0x330] sm:$0xff]
    %v162 = vld [vmem:[#allocation7 + $0x338] sm:$0xff]
    %v163 = vld [vmem:[#allocation7 + $0x340] sm:$0xff]
    %v164 = vld [vmem:[#allocation7 + $0x348] sm:$0xff]
    %v165 = vld [vmem:[#allocation7 + $0x350] sm:$0xff]
    %v166 = vld [vmem:[#allocation7 + $0x358] sm:$0xff]
    %v167 = vld [vmem:[#allocation7 + $0x360] sm:$0xff]
    %v168 = vld [vmem:[#allocation7 + $0x368] sm:$0xff]
    %v169 = vld [vmem:[#allocation7 + $0x370] sm:$0xff]
    %v170 = vld [vmem:[#allocation7 + $0x378] sm:$0xff]
    %v171 = vld [vmem:[#allocation7 + $0x380] sm:$0xff]
    %v172 = vld [vmem:[#allocation7 + $0x388] sm:$0xff]
    %v173 = vld [vmem:[#allocation7 + $0x390] sm:$0xff]
    %v174 = vld [vmem:[#allocation7 + $0x398] sm:$0xff]
    %v175 = vld [vmem:[#allocation7 + $0x3a0] sm:$0xff]
    %v176 = vld [vmem:[#allocation7 + $0x3a8] sm:$0xff]
    %v177 = vld [vmem:[#allocation7 + $0x3b0] sm:$0xff]
    %v178 = vld [vmem:[#allocation7 + $0x3b8] sm:$0xff]
    %v179 = vld [vmem:[#allocation7 + $0x3c0] sm:$0xff]
    %v180 = vld [vmem:[#allocation7 + $0x3c8] sm:$0xff]
    %v181 = vld [vmem:[#allocation7 + $0x3d0] sm:$0xff]
    %v182 = vld [vmem:[#allocation7 + $0x3d8] sm:$0xff]
    %v183 = vld [vmem:[#allocation7 + $0x3e0] sm:$0xff]
    %v184 = vld [vmem:[#allocation7 + $0x3e8] sm:$0xff]
    %v185 = vld [vmem:[#allocation7 + $0x3f0] sm:$0xff]
    %v186 = vld [vmem:[#allocation7 + $0x3f8] sm:$0xff]
    %v188 = vlaneseq
    %v189 = vshrl.u32 %v188, 7
    %v190 = vsub.s32 0, %v189
    %v191 = vrot.slane %v58, %v190
    %v192 = vlaneseq
    %v193 = vshrl.u32 %v192, 7
    %v194 = vsub.s32 1, %v193
    %v195 = vrot.slane %v58, %v194
    %198 = vmatprep.subr.mxu0 %v60
    %199 = vmatpush1.msra.mxu0 %v59
    %200 = vmatprep.subr.mxu0 %v64
    %201 = vmatpush1.msra.mxu0 %v63
    %202 = vmatprep.subr.mxu0 %v68
    %203 = vmatpush1.msra.mxu0 %v67
    %204 = vmatprep.subr.mxu0 %v72
    %205 = vmatpush1.msra.mxu0 %v71
    %206 = vmatprep.subr.mxu0 %v76
    %207 = vmatpush1.msra.mxu0 %v75
    %208 = vmatprep.subr.mxu0 %v80
    %209 = vmatpush1.msra.mxu0 %v79
    %210 = vmatprep.subr.mxu0 %v84
    %211 = vmatpush1.msra.mxu0 %v83
    %212 = vmatprep.subr.mxu0 %v88
    %213 = vmatpush1.msra.mxu0 %v87
    %214 = vmatprep.subr.mxu0 %v92
    %215 = vmatpush1.msra.mxu0 %v91
    %216 = vmatprep.subr.mxu0 %v96
    %217 = vmatpush1.msra.mxu0 %v95
    %218 = vmatprep.subr.mxu0 %v100
    %219 = vmatpush1.msra.mxu0 %v99
    %220 = vmatprep.subr.mxu0 %v104
    %221 = vmatpush1.msra.mxu0 %v103
    %222 = vmatprep.subr.mxu0 %v108
    %223 = vmatpush1.msra.mxu0 %v107
    %224 = vmatprep.subr.mxu0 %v112
    %225 = vmatpush1.msra.mxu0 %v111
    %226 = vmatprep.subr.mxu0 %v116
    %227 = vmatpush1.msra.mxu0 %v115
    %228 = vmatprep.subr.mxu0 %v120
    %229 = vmatpush1.msra.mxu0 %v119
    %230 = vmatprep.subr.mxu0 %v124
    %231 = vmatpush1.msra.mxu0 %v123
    %232 = vmatprep.subr.mxu0 %v128
    %233 = vmatpush1.msra.mxu0 %v127
    %234 = vmatprep.subr.mxu0 %v132
    %235 = vmatpush1.msra.mxu0 %v131
    %236 = vmatprep.subr.mxu0 %v136
    %237 = vmatpush1.msra.mxu0 %v135
    %238 = vmatprep.subr.mxu0 %v140
    %239 = vmatpush1.msra.mxu0 %v139
    %240 = vmatprep.subr.mxu0 %v144
    %241 = vmatpush1.msra.mxu0 %v143
    %242 = vmatprep.subr.mxu0 %v148
    %243 = vmatpush1.msra.mxu0 %v147
    %244 = vmatprep.subr.mxu0 %v152
    %245 = vmatpush1.msra.mxu0 %v151
    %246 = vmatprep.subr.mxu0 %v156
    %247 = vmatpush1.msra.mxu0 %v155
    %248 = vmatprep.subr.mxu0 %v160
    %249 = vmatpush1.msra.mxu0 %v159
    %250 = vmatprep.subr.mxu0 %v164
    %251 = vmatpush1.msra.mxu0 %v163
    %252 = vmatprep.subr.mxu0 %v168
    %253 = vmatpush1.msra.mxu0 %v167
    %254 = vmatprep.subr.mxu0 %v172
    %255 = vmatpush1.msra.mxu0 %v171
    %256 = vmatprep.subr.mxu0 %v176
    %257 = vmatpush1.msra.mxu0 %v175
    %258 = vmatprep.subr.mxu0 %v180
    %259 = vmatpush1.msra.mxu0 %v179
    %260 = vmatprep.subr.mxu0 %v184
    %261 = vmatpush1.msra.mxu0 %v183
    %262 = vmatprep.mubr.f32.mxu0 %v195
    %263 = vmatmul.mubr.f32.gmra.mrb[0].mxu0 %v191
    %v264 = vpop.f32.mrb[0].mxu0
    %v265 = vadd.f32 0.0, %v264
    %v266 = vpop.f32.mrb[0].mxu0
    %v267 = vadd.f32 0.0, %v266
    %268 = vdwg.mxu0
    %269 = vmatprep.subr.mxu0 %v62
    %270 = vmatpush1.msra.mxu0 %v61
    %271 = vmatprep.subr.mxu0 %v66
    %272 = vmatpush1.msra.mxu0 %v65
    %273 = vmatprep.subr.mxu0 %v70
    %274 = vmatpush1.msra.mxu0 %v69
    %275 = vmatprep.subr.mxu0 %v74
    %276 = vmatpush1.msra.mxu0 %v73
    %277 = vmatprep.subr.mxu0 %v78
    %278 = vmatpush1.msra.mxu0 %v77
    %279 = vmatprep.subr.mxu0 %v82
    %280 = vmatpush1.msra.mxu0 %v81
    %281 = vmatprep.subr.mxu0 %v86
    %282 = vmatpush1.msra.mxu0 %v85
    %283 = vmatprep.subr.mxu0 %v90
    %284 = vmatpush1.msra.mxu0 %v89
    %285 = vmatprep.subr.mxu0 %v94
    %286 = vmatpush1.msra.mxu0 %v93
    %287 = vmatprep.subr.mxu0 %v98
    %288 = vmatpush1.msra.mxu0 %v97
    %289 = vmatprep.subr.mxu0 %v102
    %290 = vmatpush1.msra.mxu0 %v101
    %291 = vmatprep.subr.mxu0 %v106
    %292 = vmatpush1.msra.mxu0 %v105
    %293 = vmatprep.subr.mxu0 %v110
    %294 = vmatpush1.msra.mxu0 %v109
    %295 = vmatprep.subr.mxu0 %v114
    %296 = vmatpush1.msra.mxu0 %v113
    %297 = vmatprep.subr.mxu0 %v118
    %298 = vmatpush1.msra.mxu0 %v117
    %299 = vmatprep.subr.mxu0 %v122
    %300 = vmatpush1.msra.mxu0 %v121
    %301 = vmatprep.subr.mxu0 %v126
    %302 = vmatpush1.msra.mxu0 %v125
    %303 = vmatprep.subr.mxu0 %v130
    %304 = vmatpush1.msra.mxu0 %v129
    %305 = vmatprep.subr.mxu0 %v134
    %306 = vmatpush1.msra.mxu0 %v133
    %307 = vmatprep.subr.mxu0 %v138
    %308 = vmatpush1.msra.mxu0 %v137
    %309 = vmatprep.subr.mxu0 %v142
    %310 = vmatpush1.msra.mxu0 %v141
    %311 = vmatprep.subr.mxu0 %v146
    %312 = vmatpush1.msra.mxu0 %v145
    %313 = vmatprep.subr.mxu0 %v150
    %314 = vmatpush1.msra.mxu0 %v149
    %315 = vmatprep.subr.mxu0 %v154
    %316 = vmatpush1.msra.mxu0 %v153
    %317 = vmatprep.subr.mxu0 %v158
    %318 = vmatpush1.msra.mxu0 %v157
    %319 = vmatprep.subr.mxu0 %v162
    %320 = vmatpush1.msra.mxu0 %v161
    %321 = vmatprep.subr.mxu0 %v166
    %322 = vmatpush1.msra.mxu0 %v165
    %323 = vmatprep.subr.mxu0 %v170
    %324 = vmatpush1.msra.mxu0 %v169
    %325 = vmatprep.subr.mxu0 %v174
    %326 = vmatpush1.msra.mxu0 %v173
    %327 = vmatprep.subr.mxu0 %v178
    %328 = vmatpush1.msra.mxu0 %v177
    %329 = vmatprep.subr.mxu0 %v182
    %330 = vmatpush1.msra.mxu0 %v181
    %331 = vmatprep.subr.mxu0 %v186
    %332 = vmatpush1.msra.mxu0 %v185
    %333 = vmatprep.mubr.f32.mxu0 %v195
    %334 = vmatmul.mubr.f32.gmra.mrb[0].mxu0 %v191
    %v335 = vpop.f32.mrb[0].mxu0
    %v336 = vadd.f32 0.0, %v335
    %v337 = vpop.f32.mrb[0].mxu0
    %v338 = vadd.f32 0.0, %v337
    %339 = vdwg.mxu0
    %v340 = vld [vmem:[#allocation2] sm:$0x3]
    %v342 = vlaneseq
    %v343 = vshrl.u32 %v342, 7
    %v344 = vsub.s32 0, %v343
    %v345 = vrot.slane %v340, %v344
    %v346 = vlaneseq
    %v347 = vshrl.u32 %v346, 7
    %v348 = vsub.s32 1, %v347
    %v349 = vrot.slane %v340, %v348
    %v352 = vmul.f32 %v265, %v345
    %v353 = vmul.f32 %v267, %v349
    %vm354 = vcmask 1040384
    %v355 = vsel %vm354, %v352, 0.0
    %v356 = vsel %vm354, %v353, 0.0
    %v357 = vadd.f32 %v355, %v356
    %358 = vadd.xlane.f32.xlu0 %v357
    %v359 = vpop.xlane.xlu0 %358
    %v360 = vld [vmem:[%s3] sm:$0x3]
    %v361 = vmul.f32 %v58, %v360
    %v363 = vlaneseq
    %v364 = vshrl.u32 %v363, 7
    %v365 = vsub.s32 0, %v364
    %v366 = vrot.slane %v361, %v365
    %v367 = vlaneseq
    %v368 = vshrl.u32 %v367, 7
    %v369 = vsub.s32 1, %v368
    %v370 = vrot.slane %v361, %v369
    %v373 = vsel %vm354, %v366, 0.0
    %v374 = vsel %vm354, %v370, 0.0
    %v375 = vadd.f32 %v373, %v374
    %376 = vadd.xlane.f32.xlu0 %v375
    %v377 = vpop.xlane.xlu0 %376
    %v378 = vadd.f32 %v359, %v377
    %v379 = vld [vmem:[#allocation5] sm:$0xff]
    %v380 = vld [vmem:[#allocation5 + $0x8] sm:$0xff]
    %381 = vmatprep.subr.mxu0 %v380
    %382 = vmatpush1.xpose.msra.mxu0 %v379
    %383 = vmatprep.subr.mxu0 0.0
    %384 = vmatpush1.xpose.msra.mxu0 0.0
    %385 = vmatprep.subr.mxu0 0.0
    %386 = vmatpush1.xpose.msra.mxu0 0.0
    %387 = vmatprep.subr.mxu0 0.0
    %388 = vmatpush1.xpose.msra.mxu0 0.0
    %389 = vmatprep.subr.mxu0 0.0
    %390 = vmatpush1.xpose.msra.mxu0 0.0
    %391 = vmatprep.subr.mxu0 0.0
    %392 = vmatpush1.xpose.msra.mxu0 0.0
    %393 = vmatprep.subr.mxu0 0.0
    %394 = vmatpush1.xpose.msra.mxu0 0.0
    %395 = vmatprep.subr.mxu0 0.0
    %396 = vmatpush1.xpose.msra.mxu0 0.0
    %397 = vmatprep.subr.mxu0 0.0
    %398 = vmatpush1.xpose.msra.mxu0 0.0
    %399 = vmatprep.subr.mxu0 0.0
    %400 = vmatpush1.xpose.msra.mxu0 0.0
    %401 = vmatprep.subr.mxu0 0.0
    %402 = vmatpush1.xpose.msra.mxu0 0.0
    %403 = vmatprep.subr.mxu0 0.0
    %404 = vmatpush1.xpose.msra.mxu0 0.0
    %405 = vmatprep.subr.mxu0 0.0
    %406 = vmatpush1.xpose.msra.mxu0 0.0
    %407 = vmatprep.subr.mxu0 0.0
    %408 = vmatpush1.xpose.msra.mxu0 0.0
    %409 = vmatprep.subr.mxu0 0.0
    %410 = vmatpush1.xpose.msra.mxu0 0.0
    %411 = vmatprep.subr.mxu0 0.0
    %412 = vmatpush1.xpose.msra.mxu0 0.0
    %413 = vmatprep.subr.mxu0 0.0
    %414 = vmatpush1.xpose.msra.mxu0 0.0
    %415 = vmatprep.subr.mxu0 0.0
    %416 = vmatpush1.xpose.msra.mxu0 0.0
    %417 = vmatprep.subr.mxu0 0.0
    %418 = vmatpush1.xpose.msra.mxu0 0.0
    %419 = vmatprep.subr.mxu0 0.0
    %420 = vmatpush1.xpose.msra.mxu0 0.0
    %421 = vmatprep.subr.mxu0 0.0
    %422 = vmatpush1.xpose.msra.mxu0 0.0
    %423 = vmatprep.subr.mxu0 0.0
    %424 = vmatpush1.xpose.msra.mxu0 0.0
    %425 = vmatprep.subr.mxu0 0.0
    %426 = vmatpush1.xpose.msra.mxu0 0.0
    %427 = vmatprep.subr.mxu0 0.0
    %428 = vmatpush1.xpose.msra.mxu0 0.0
    %429 = vmatprep.subr.mxu0 0.0
    %430 = vmatpush1.xpose.msra.mxu0 0.0
    %431 = vmatprep.subr.mxu0 0.0
    %432 = vmatpush1.xpose.msra.mxu0 0.0
    %433 = vmatprep.subr.mxu0 0.0
    %434 = vmatpush1.xpose.msra.mxu0 0.0
    %435 = vmatprep.subr.mxu0 0.0
    %436 = vmatpush1.xpose.msra.mxu0 0.0
    %437 = vmatprep.subr.mxu0 0.0
    %438 = vmatpush1.xpose.msra.mxu0 0.0
    %439 = vmatprep.subr.mxu0 0.0
    %440 = vmatpush1.xpose.msra.mxu0 0.0
    %441 = vmatprep.subr.mxu0 0.0
    %442 = vmatpush1.xpose.msra.mxu0 0.0
    %443 = vmatprep.subr.mxu0 0.0
    %444 = vmatpush1.xpose.msra.mxu0 0.0
    %445 = vmatprep.mubr.f32.mxu0 %v338
    %446 = vmatmul.mubr.f32.gmra.mrb[0].mxu0 %v336
    %v447 = vpop.f32.mrb[0].mxu0
    %v448 = vadd.f32 %v378, %v447
    %v449 = vpop.f32.mrb[0].mxu0
    %450 = vdwg.mxu0
    %vm451 = vcmask 57344
    %v452 = vsel %vm451, %v448, -inf
    %453 = vmax.xlane.f32.xlu0 %v452
    %v454 = vpop.xlane.xlu0 %453
    %v455 = vsub.f32 %v448, %v454
    %v456 = vmul.f32 %v455, 1.442695
    %v457 = vpow.pop %v456
    %v458 = vsel %vm451, %v457, 0.0
    %459 = vadd.xlane.f32.xlu0 %v458
    %v460 = vpop.xlane.xlu0 %459
    %v461 = vrcp.pop %v460
    %v462 = vmul.f32 %v457, %v461
    %463 = vst.msk [vmem:[#allocation8] sm:$0x1] %vm451, %v462
    // Predicated region
    $region34: #{tpu_custom_call.1} parent=1 // pred_check
      _
    $region35: #{tpu_custom_call.1} parent=1 // pred_check_branch
      %465 = sbr.rel (0) target = $region37
    $region36: #{tpu_custom_call.1} parent=1 // pred_region
      %s467 = ssub.s32 16, 16
      %468 = vsyncadd [#allocation4], %s467
      %s470 = sshll.u32 [#allocation8], 4
      %s471 = int_to_ptr.vmem [resolvable:$true] %s470
      %473 = dma.vmem_to_hbm [thread:$0]  %s471, 16, %s5, [#allocation4]
    $region37: #{tpu_custom_call.1} parent=1 // pred_fallthru
      _
    // Predicated region
    $region38: #{tpu_custom_call.1} parent=1 // pred_check
      _
    $region39: #{tpu_custom_call.1} parent=1 // pred_check_branch
      %475 = sbr.rel (0) target = $region41
    $region40: #{tpu_custom_call.1} parent=1 // pred_region
      %476 = dma.done [#allocation4], 16
    $region41: #{tpu_custom_call.1} parent=1 // pred_fallthru
      _
    %477 = vsyncpa [#allocation3], 1
    %478 = vsyncpa [#allocation6], 1
    %479 = vsyncpa [#allocation4], 1

</llo_original>
